<compile_context>
chip_gen: v5e
topology: v5e:2x2
jax: 0.10.0
libtpu: 0.0.40
codegen_flags: <defaults>
</compile_context>

<pallas_src>
import functools

import jax
import jax.numpy as jnp
from jax.experimental import pallas as pl
from jax.experimental.pallas import tpu as pltpu


HIDDEN = 32


def rnn_kernel(x_ref, wih_ref, bias_ref, whh_ref, wout_ref, bout_ref, y_ref, *, T, B):
    """Fused: input projection + T-step tanh recurrence + output Linear.

    x_ref   : (T*B, F)  time-major flattened input
    wih_ref : (F, H)    input->hidden weight, pre-transposed
    bias_ref: (1, H)    b_ih + b_hh
    whh_ref : (H, H)    hidden->hidden weight, pre-transposed
    wout_ref: (H, O)    output Linear weight, pre-transposed
    bout_ref: (1, O)
    y_ref   : (1, B, O)
    """
    H = whh_ref.shape[0]

    # Input projection for all T steps at once (one MXU push, off the serial path).
    xw = (jnp.dot(x_ref[...], wih_ref[...], preferred_element_type=jnp.float32)
          + bias_ref[...])                              # (T*B, H)

    whh = whh_ref[...]                                  # keep recurrent weight in vregs
    h = jnp.zeros((B, H), jnp.float32)

    # T is small and static: fully-unrolled Python loop -> static sublane slices,
    # only tanh(xw_t + h @ W_hh^T) on the serial dependency chain.
    for t in range(T):
        h = jnp.tanh(
            xw[t * B:(t + 1) * B, :]
            + jnp.dot(h, whh, preferred_element_type=jnp.float32)
        )

    y = (jnp.dot(h, wout_ref[...], preferred_element_type=jnp.float32)
         + bout_ref[...])
    y_ref[0] = y.astype(y_ref.dtype)


def _rnn_forward_impl(x, params):
    """x: (B, T, F) batch-first, like the PyTorch module. Returns (1, B, O)."""
    w_ih, w_hh, b_ih, b_hh, w_out, b_out = params
    B, T, F = x.shape
    H = w_ih.shape[0]
    O = w_out.shape[0]

    # Only layout plumbing in the wrapper: batch-first -> time-major, flattened.
    x_tm = jnp.swapaxes(x, 0, 1).reshape(T * B, F).astype(jnp.float32)

    cost = pl.CostEstimate(
        flops=2 * (T * B * F * H + T * B * H * H + B * H * O),
        transcendentals=T * B * H,
        bytes_accessed=4 * (T * B * F + F * H + H + H * H + H * O + O + B * O),
    )

    vmem = pl.BlockSpec(memory_space=pltpu.MemorySpace.VMEM)
    y = pl.pallas_call(
        functools.partial(rnn_kernel, T=T, B=B),
        out_shape=jax.ShapeDtypeStruct((1, B, O), x.dtype),
        in_specs=[vmem] * 6,
        out_specs=vmem,
        cost_estimate=cost,
    )(
        x_tm,
        w_ih.T,                         # (F, H)
        (b_ih + b_hh).reshape(1, H),    # (1, H)
        w_hh.T,                         # (H, H)
        w_out.T,                        # (H, O)
        b_out.reshape(1, O),            # (1, O)
    )
    return y


rnn_forward = jax.jit(_rnn_forward_impl)


def reference_forward(x, params):
    w_ih, w_hh, b_ih, b_hh, w_out, b_out = params
    B, T, F = x.shape
    H = w_ih.shape[0]

    def step(h, x_t):
        h_new = jnp.tanh(x_t @ w_ih.T + b_ih + h @ w_hh.T + b_hh)
        return h_new, h_new

    h0 = jnp.zeros((B, H), jnp.float32)
    h_last, _ = jax.lax.scan(step, h0, jnp.transpose(x, (1, 0, 2)))
    return (h_last @ w_out.T + b_out)[None]


def init_params(key, in_features, out_features, hidden=HIDDEN):
    ks = jax.random.split(key, 6)
    bound = 1.0 / jnp.sqrt(hidden)
    w_ih = jax.random.uniform(ks[0], (hidden, in_features), jnp.float32, -bound, bound)
    w_hh = jax.random.uniform(ks[1], (hidden, hidden), jnp.float32, -bound, bound)
    b_ih = jax.random.uniform(ks[2], (hidden,), jnp.float32, -bound, bound)
    b_hh = jax.random.uniform(ks[3], (hidden,), jnp.float32, -bound, bound)
    w_out = jax.random.uniform(ks[4], (out_features, hidden), jnp.float32, -bound, bound)
    b_out = jax.random.uniform(ks[5], (out_features,), jnp.float32, -bound, bound)
    return (w_ih, w_hh, b_ih, b_hh, w_out, b_out)


if __name__ == "__main__":
    B, T, IN_FEATURES, OUT_FEATURES = 2, 8, 8, 4

    key = jax.random.PRNGKey(0)
    k_x, k_p = jax.random.split(key)
    x = jax.random.normal(k_x, (B, T, IN_FEATURES), jnp.float32)
    params = init_params(k_p, IN_FEATURES, OUT_FEATURES)

    y = rnn_forward(x, params)
    y = jax.block_until_ready(y)

    y_ref = reference_forward(x, params)
    assert y.shape == (1, B, OUT_FEATURES), y.shape
    assert jnp.allclose(y, y_ref, atol=1e-5, rtol=1e-5), (
        f"max abs err {jnp.max(jnp.abs(y - y_ref))}")

    print("KERNEL_OK")
</pallas_src>

<mosaic_0001>
module attributes {stable_mosaic.version = 11 : i64} {
  func.func @rnn_kernel(%arg0: memref<16x8xf32, #tpu.memory_space<vmem>>, %arg1: memref<8x32xf32, #tpu.memory_space<vmem>>, %arg2: memref<1x32xf32, #tpu.memory_space<vmem>>, %arg3: memref<32x32xf32, #tpu.memory_space<vmem>>, %arg4: memref<32x4xf32, #tpu.memory_space<vmem>>, %arg5: memref<1x4xf32, #tpu.memory_space<vmem>>, %arg6: memref<1x2x4xf32, #tpu.memory_space<vmem>>) attributes {dimension_semantics = [], scalar_prefetch = 0 : i64, scratch_operands = 0 : i64, tpu.core_type = #tpu.core_type<tc>} {
    %c0 = arith.constant 0 : index
    %c0_0 = arith.constant 0 : index
    %0 = vector.load %arg0[%c0, %c0_0] : memref<16x8xf32, #tpu.memory_space<vmem>>, vector<16x8xf32>
    %c0_1 = arith.constant 0 : index
    %c0_2 = arith.constant 0 : index
    %1 = vector.load %arg1[%c0_1, %c0_2] : memref<8x32xf32, #tpu.memory_space<vmem>>, vector<8x32xf32>
    %cst = arith.constant dense<0.000000e+00> : vector<16x32xf32>
    %2 = tpu.matmul %0, %1, %cst {dimension_numbers = #tpu.dot_dimension_numbers<[1], [0], [0], [1], [0, 0, 1, 1], [], []>} : vector<16x8xf32>, vector<8x32xf32>, vector<16x32xf32> -> vector<16x32xf32>
    %c0_3 = arith.constant 0 : index
    %c0_4 = arith.constant 0 : index
    %3 = vector.load %arg2[%c0_3, %c0_4] : memref<1x32xf32, #tpu.memory_space<vmem>>, vector<1x32xf32>
    %4 = vector.broadcast %3 : vector<1x32xf32> to vector<16x32xf32>
    %5 = arith.addf %2, %4 : vector<16x32xf32>
    %c0_5 = arith.constant 0 : index
    %c0_6 = arith.constant 0 : index
    %6 = vector.load %arg3[%c0_5, %c0_6] : memref<32x32xf32, #tpu.memory_space<vmem>>, vector<32x32xf32>
    %cst_7 = arith.constant 0.000000e+00 : f32
    %7 = vector.broadcast %cst_7 : f32 to vector<2x32xf32>
    %8 = vector.extract_strided_slice %5 {offsets = [0, 0], sizes = [2, 32], strides = [1, 1]} : vector<16x32xf32> to vector<2x32xf32>
    %cst_8 = arith.constant dense<0.000000e+00> : vector<2x32xf32>
    %9 = tpu.matmul %7, %6, %cst_8 {dimension_numbers = #tpu.dot_dimension_numbers<[1], [0], [0], [1], [0, 0, 1, 1], [], []>} : vector<2x32xf32>, vector<32x32xf32>, vector<2x32xf32> -> vector<2x32xf32>
    %10 = arith.addf %8, %9 : vector<2x32xf32>
    %11 = math.tanh %10 : vector<2x32xf32>
    %12 = vector.extract_strided_slice %5 {offsets = [2, 0], sizes = [2, 32], strides = [1, 1]} : vector<16x32xf32> to vector<2x32xf32>
    %cst_9 = arith.constant dense<0.000000e+00> : vector<2x32xf32>
    %13 = tpu.matmul %11, %6, %cst_9 {dimension_numbers = #tpu.dot_dimension_numbers<[1], [0], [0], [1], [0, 0, 1, 1], [], []>} : vector<2x32xf32>, vector<32x32xf32>, vector<2x32xf32> -> vector<2x32xf32>
    %14 = arith.addf %12, %13 : vector<2x32xf32>
    %15 = math.tanh %14 : vector<2x32xf32>
    %16 = vector.extract_strided_slice %5 {offsets = [4, 0], sizes = [2, 32], strides = [1, 1]} : vector<16x32xf32> to vector<2x32xf32>
    %cst_10 = arith.constant dense<0.000000e+00> : vector<2x32xf32>
    %17 = tpu.matmul %15, %6, %cst_10 {dimension_numbers = #tpu.dot_dimension_numbers<[1], [0], [0], [1], [0, 0, 1, 1], [], []>} : vector<2x32xf32>, vector<32x32xf32>, vector<2x32xf32> -> vector<2x32xf32>
    %18 = arith.addf %16, %17 : vector<2x32xf32>
    %19 = math.tanh %18 : vector<2x32xf32>
    %20 = vector.extract_strided_slice %5 {offsets = [6, 0], sizes = [2, 32], strides = [1, 1]} : vector<16x32xf32> to vector<2x32xf32>
    %cst_11 = arith.constant dense<0.000000e+00> : vector<2x32xf32>
    %21 = tpu.matmul %19, %6, %cst_11 {dimension_numbers = #tpu.dot_dimension_numbers<[1], [0], [0], [1], [0, 0, 1, 1], [], []>} : vector<2x32xf32>, vector<32x32xf32>, vector<2x32xf32> -> vector<2x32xf32>
    %22 = arith.addf %20, %21 : vector<2x32xf32>
    %23 = math.tanh %22 : vector<2x32xf32>
    %24 = vector.extract_strided_slice %5 {offsets = [8, 0], sizes = [2, 32], strides = [1, 1]} : vector<16x32xf32> to vector<2x32xf32>
    %cst_12 = arith.constant dense<0.000000e+00> : vector<2x32xf32>
    %25 = tpu.matmul %23, %6, %cst_12 {dimension_numbers = #tpu.dot_dimension_numbers<[1], [0], [0], [1], [0, 0, 1, 1], [], []>} : vector<2x32xf32>, vector<32x32xf32>, vector<2x32xf32> -> vector<2x32xf32>
    %26 = arith.addf %24, %25 : vector<2x32xf32>
    %27 = math.tanh %26 : vector<2x32xf32>
    %28 = vector.extract_strided_slice %5 {offsets = [10, 0], sizes = [2, 32], strides = [1, 1]} : vector<16x32xf32> to vector<2x32xf32>
    %cst_13 = arith.constant dense<0.000000e+00> : vector<2x32xf32>
    %29 = tpu.matmul %27, %6, %cst_13 {dimension_numbers = #tpu.dot_dimension_numbers<[1], [0], [0], [1], [0, 0, 1, 1], [], []>} : vector<2x32xf32>, vector<32x32xf32>, vector<2x32xf32> -> vector<2x32xf32>
    %30 = arith.addf %28, %29 : vector<2x32xf32>
    %31 = math.tanh %30 : vector<2x32xf32>
    %32 = vector.extract_strided_slice %5 {offsets = [12, 0], sizes = [2, 32], strides = [1, 1]} : vector<16x32xf32> to vector<2x32xf32>
    %cst_14 = arith.constant dense<0.000000e+00> : vector<2x32xf32>
    %33 = tpu.matmul %31, %6, %cst_14 {dimension_numbers = #tpu.dot_dimension_numbers<[1], [0], [0], [1], [0, 0, 1, 1], [], []>} : vector<2x32xf32>, vector<32x32xf32>, vector<2x32xf32> -> vector<2x32xf32>
    %34 = arith.addf %32, %33 : vector<2x32xf32>
    %35 = math.tanh %34 : vector<2x32xf32>
    %36 = vector.extract_strided_slice %5 {offsets = [14, 0], sizes = [2, 32], strides = [1, 1]} : vector<16x32xf32> to vector<2x32xf32>
    %cst_15 = arith.constant dense<0.000000e+00> : vector<2x32xf32>
    %37 = tpu.matmul %35, %6, %cst_15 {dimension_numbers = #tpu.dot_dimension_numbers<[1], [0], [0], [1], [0, 0, 1, 1], [], []>} : vector<2x32xf32>, vector<32x32xf32>, vector<2x32xf32> -> vector<2x32xf32>
    %38 = arith.addf %36, %37 : vector<2x32xf32>
    %39 = math.tanh %38 : vector<2x32xf32>
    %c0_16 = arith.constant 0 : index
    %c0_17 = arith.constant 0 : index
    %40 = vector.load %arg4[%c0_16, %c0_17] : memref<32x4xf32, #tpu.memory_space<vmem>>, vector<32x4xf32>
    %cst_18 = arith.constant dense<0.000000e+00> : vector<2x4xf32>
    %41 = tpu.matmul %39, %40, %cst_18 {dimension_numbers = #tpu.dot_dimension_numbers<[1], [0], [0], [1], [0, 0, 1, 1], [], []>} : vector<2x32xf32>, vector<32x4xf32>, vector<2x4xf32> -> vector<2x4xf32>
    %c0_19 = arith.constant 0 : index
    %c0_20 = arith.constant 0 : index
    %42 = vector.load %arg5[%c0_19, %c0_20] : memref<1x4xf32, #tpu.memory_space<vmem>>, vector<1x4xf32>
    %43 = vector.broadcast %42 : vector<1x4xf32> to vector<2x4xf32>
    %44 = arith.addf %41, %43 : vector<2x4xf32>
    %c0_21 = arith.constant 0 : index
    %c0_22 = arith.constant 0 : index
    %c0_23 = arith.constant 0 : index
    %45 = vector.load %arg6[%c0_21, %c0_22, %c0_23] : memref<1x2x4xf32, #tpu.memory_space<vmem>>, vector<1x2x4xf32>
    %46 = vector.shape_cast %45 : vector<1x2x4xf32> to vector<2x4xf32>
    %47 = vector.shape_cast %44 : vector<2x4xf32> to vector<1x2x4xf32>
    tpu.vector_store %arg6[%c0_21, %c0_22, %c0_23], %47 {strides = array<i32>} : memref<1x2x4xf32, #tpu.memory_space<vmem>>, vector<1x2x4xf32>,
    return
  }
}

</mosaic_0001>

<llo_original>
// kernel: _rnn_forward_impl.1
$region0: #{_rnn_forward_impl.1}
  #allocation0 [shape = 'u32[]', space=smem, size = 0x4, offset = 0x4, fixed_abs, tag = 'smem constant byte address 0x4 - core index']
  #allocation1 [shape = 'u32[72,128]{1,0:T(1,128)}', space=vmem, size = 0x9000, scoped, tag = 'internal scratch']
  %s0 = inlined_call_operand.vmem [shape: f32[16,8], index: 0, kind: input, shape index: {}]
  %s1 = inlined_call_operand.vmem [shape: f32[8,32], index: 1, kind: input, shape index: {}]
  %s2 = inlined_call_operand.vmem [shape: f32[1,32], index: 2, kind: input, shape index: {}]
  %s3 = inlined_call_operand.vmem [shape: f32[32,32], index: 3, kind: input, shape index: {}]
  %s4 = inlined_call_operand.vmem [shape: f32[32,4], index: 4, kind: input, shape index: {}]
  %s5 = inlined_call_operand.vmem [shape: f32[1,4], index: 5, kind: input, shape index: {}]
  %s6 = inlined_call_operand.hbm [shape: f32[1,2,4], index: 6, kind: output, shape index: {}]
  %s7 = sld [smem:[#allocation0]]
  $region34: #{_rnn_forward_impl.1} parent=0
    _
  %s9 = ssub.s32 1, %s7
  %s10 = scalar_select 0, %s9, %s7
  $region1: #{_rnn_forward_impl.1} parent=0
    #allocation2 [shape = 'u8[1024]{0}', space=vmem, size = 0x400, scoped, tag = 'output window, operand 0, single buffered']
    #allocation3 [shape = 's32[1]{0}', space=sflag, size = 0x4, scoped, tag = 'scoped memory for _rnn_forward_impl.1']
    %11 = vsyncpa [#allocation3], 0
    // Predicated region
    $region2: #{_rnn_forward_impl.1} parent=1 // pred_check
      _
    $region3: #{_rnn_forward_impl.1} parent=1 // pred_check_branch
      %13 = sbr.rel (0) target = $region5
    $region4: #{_rnn_forward_impl.1} parent=1 // pred_region
      _
    $region5: #{_rnn_forward_impl.1} parent=1 // pred_fallthru
      _
    // Predicated region
    $region6: #{_rnn_forward_impl.1} parent=1 // pred_check
      _
    $region7: #{_rnn_forward_impl.1} parent=1 // pred_check_branch
      %15 = sbr.rel (0) target = $region9
    $region8: #{_rnn_forward_impl.1} parent=1 // pred_region
      _
    $region9: #{_rnn_forward_impl.1} parent=1 // pred_fallthru
      _
    // Predicated region
    $region10: #{_rnn_forward_impl.1} parent=1 // pred_check
      _
    $region11: #{_rnn_forward_impl.1} parent=1 // pred_check_branch
      %17 = sbr.rel (0) target = $region13
    $region12: #{_rnn_forward_impl.1} parent=1 // pred_region
      _
    $region13: #{_rnn_forward_impl.1} parent=1 // pred_fallthru
      _
    // Predicated region
    $region14: #{_rnn_forward_impl.1} parent=1 // pred_check
      _
    $region15: #{_rnn_forward_impl.1} parent=1 // pred_check_branch
      %19 = sbr.rel (0) target = $region17
    $region16: #{_rnn_forward_impl.1} parent=1 // pred_region
      _
    $region17: #{_rnn_forward_impl.1} parent=1 // pred_fallthru
      _
    // Predicated region
    $region18: #{_rnn_forward_impl.1} parent=1 // pred_check
      _
    $region19: #{_rnn_forward_impl.1} parent=1 // pred_check_branch
      %21 = sbr.rel (0) target = $region21
    $region20: #{_rnn_forward_impl.1} parent=1 // pred_region
      _
    $region21: #{_rnn_forward_impl.1} parent=1 // pred_fallthru
      _
    // Predicated region
    $region22: #{_rnn_forward_impl.1} parent=1 // pred_check
      _
    $region23: #{_rnn_forward_impl.1} parent=1 // pred_check_branch
      %23 = sbr.rel (0) target = $region25
    $region24: #{_rnn_forward_impl.1} parent=1 // pred_region
      _
    $region25: #{_rnn_forward_impl.1} parent=1 // pred_fallthru
      _
    %v24 = vld [vmem:[%s0] sm:$0xff]
    %v25 = vld [vmem:[%s0 + $0x8] sm:$0xff]
    %v26 = vld [vmem:[%s1] sm:$0xff]
    %v27 = vld [vmem:[%s2] sm:$0x1]
    %v29 = vperm.slane %v27, 0
    %vm31 = vcmask 64512
    %v33 = vsel %vm31, %v24, 0
    %v36 = vsel %vm31, %v25, 0
    %38 = vmatpush.msra.mxu0 0.0
    %39 = vmatpush.msra.mxu0 0.0
    %40 = vmatpush.msra.mxu0 0.0
    %41 = vmatpush.msra.mxu0 0.0
    %42 = vmatpush.msra.mxu0 0.0
    %43 = vmatpush.msra.mxu0 0.0
    %44 = vmatpush.msra.mxu0 0.0
    %45 = vmatpush.msra.mxu0 0.0
    %46 = vmatpush.msra.mxu0 0.0
    %47 = vmatpush.msra.mxu0 0.0
    %48 = vmatpush.msra.mxu0 0.0
    %49 = vmatpush.msra.mxu0 0.0
    %50 = vmatpush.msra.mxu0 0.0
    %51 = vmatpush.msra.mxu0 0.0
    %52 = vmatpush.msra.mxu0 0.0
    %53 = vmatpush.msra.mxu0 %v26
    %54 = vmatmul.f32.gmra.mxu0 %v33
    %v55 = vpop.f32.mrf.mxu0
    %v56 = vadd.f32 %v29, %v55
    %57 = vmatmul.f32.gmra.mxu0 %v36
    %v58 = vpop.f32.mrf.mxu0
    %v59 = vadd.f32 %v29, %v58
    %60 = vdwg.mxu0
    %v61 = vld [vmem:[%s3] sm:$0xff]
    %v62 = vld [vmem:[%s3 + $0x8] sm:$0xff]
    %v63 = vld [vmem:[%s3 + $0x10] sm:$0xff]
    %v64 = vld [vmem:[%s3 + $0x18] sm:$0xff]
    %vm65 = vcmask 261120
    %v67 = vsel %vm65, 0.0, 0
    %69 = vmatpush.msra.mxu0 0.0
    %70 = vmatpush.msra.mxu0 0.0
    %71 = vmatpush.msra.mxu0 0.0
    %72 = vmatpush.msra.mxu0 0.0
    %73 = vmatpush.msra.mxu0 0.0
    %74 = vmatpush.msra.mxu0 0.0
    %75 = vmatpush.msra.mxu0 0.0
    %76 = vmatpush.msra.mxu0 0.0
    %77 = vmatpush.msra.mxu0 0.0
    %78 = vmatpush.msra.mxu0 0.0
    %79 = vmatpush.msra.mxu0 0.0
    %80 = vmatpush.msra.mxu0 0.0
    %81 = vmatpush.msra.mxu0 %v64
    %82 = vmatpush.msra.mxu0 %v63
    %83 = vmatpush.msra.mxu0 %v62
    %84 = vmatpush.msra.mxu0 %v61
    %85 = vmatmul.f32.gmra.mxu0 %v67
    %v86 = vpop.f32.mrf.mxu0
    %v87 = vadd.f32 0.0, %v86
    %88 = vdwg.mxu0
    %v89 = vadd.f32 %v56, %v87
    %v90 = vtanh.pop %v89
    %v92 = vsel %vm65, %v90, 0
    %94 = vmatpush.msra.mxu0 0.0
    %95 = vmatpush.msra.mxu0 0.0
    %96 = vmatpush.msra.mxu0 0.0
    %97 = vmatpush.msra.mxu0 0.0
    %98 = vmatpush.msra.mxu0 0.0
    %99 = vmatpush.msra.mxu0 0.0
    %100 = vmatpush.msra.mxu0 0.0
    %101 = vmatpush.msra.mxu0 0.0
    %102 = vmatpush.msra.mxu0 0.0
    %103 = vmatpush.msra.mxu0 0.0
    %104 = vmatpush.msra.mxu0 0.0
    %105 = vmatpush.msra.mxu0 0.0
    %106 = vmatpush.msra.mxu0 %v64
    %107 = vmatpush.msra.mxu0 %v63
    %108 = vmatpush.msra.mxu0 %v62
    %109 = vmatpush.msra.mxu0 %v61
    %110 = vmatmul.f32.gmra.mxu0 %v92
    %v111 = vpop.f32.mrf.mxu0
    %v112 = vadd.f32 0.0, %v111
    %113 = vdwg.mxu0
    %v115 = vrot.slane %v112, 6
    %v117 = vadd.f32 %v56, %v115
    %v118 = vtanh.pop %v117
    %v120 = vrot.slane %v118, 2
    %v121 = vsel %vm65, %v120, 0
    %123 = vmatpush.msra.mxu0 0.0
    %124 = vmatpush.msra.mxu0 0.0
    %125 = vmatpush.msra.mxu0 0.0
    %126 = vmatpush.msra.mxu0 0.0
    %127 = vmatpush.msra.mxu0 0.0
    %128 = vmatpush.msra.mxu0 0.0
    %129 = vmatpush.msra.mxu0 0.0
    %130 = vmatpush.msra.mxu0 0.0
    %131 = vmatpush.msra.mxu0 0.0
    %132 = vmatpush.msra.mxu0 0.0
    %133 = vmatpush.msra.mxu0 0.0
    %134 = vmatpush.msra.mxu0 0.0
    %135 = vmatpush.msra.mxu0 %v64
    %136 = vmatpush.msra.mxu0 %v63
    %137 = vmatpush.msra.mxu0 %v62
    %138 = vmatpush.msra.mxu0 %v61
    %139 = vmatmul.f32.gmra.mxu0 %v121
    %v140 = vpop.f32.mrf.mxu0
    %v141 = vadd.f32 0.0, %v140
    %142 = vdwg.mxu0
    %v144 = vrot.slane %v141, 4
    %v146 = vadd.f32 %v56, %v144
    %v147 = vtanh.pop %v146
    %v149 = vrot.slane %v147, 4
    %v150 = vsel %vm65, %v149, 0
    %152 = vmatpush.msra.mxu0 0.0
    %153 = vmatpush.msra.mxu0 0.0
    %154 = vmatpush.msra.mxu0 0.0
    %155 = vmatpush.msra.mxu0 0.0
    %156 = vmatpush.msra.mxu0 0.0
    %157 = vmatpush.msra.mxu0 0.0
    %158 = vmatpush.msra.mxu0 0.0
    %159 = vmatpush.msra.mxu0 0.0
    %160 = vmatpush.msra.mxu0 0.0
    %161 = vmatpush.msra.mxu0 0.0
    %162 = vmatpush.msra.mxu0 0.0
    %163 = vmatpush.msra.mxu0 0.0
    %164 = vmatpush.msra.mxu0 %v64
    %165 = vmatpush.msra.mxu0 %v63
    %166 = vmatpush.msra.mxu0 %v62
    %167 = vmatpush.msra.mxu0 %v61
    %168 = vmatmul.f32.gmra.mxu0 %v150
    %v169 = vpop.f32.mrf.mxu0
    %v170 = vadd.f32 0.0, %v169
    %171 = vdwg.mxu0
    %v173 = vrot.slane %v170, 2
    %v175 = vadd.f32 %v56, %v173
    %v176 = vtanh.pop %v175
    %v178 = vrot.slane %v176, 6
    %v179 = vsel %vm65, %v178, 0
    %181 = vmatpush.msra.mxu0 0.0
    %182 = vmatpush.msra.mxu0 0.0
    %183 = vmatpush.msra.mxu0 0.0
    %184 = vmatpush.msra.mxu0 0.0
    %185 = vmatpush.msra.mxu0 0.0
    %186 = vmatpush.msra.mxu0 0.0
    %187 = vmatpush.msra.mxu0 0.0
    %188 = vmatpush.msra.mxu0 0.0
    %189 = vmatpush.msra.mxu0 0.0
    %190 = vmatpush.msra.mxu0 0.0
    %191 = vmatpush.msra.mxu0 0.0
    %192 = vmatpush.msra.mxu0 0.0
    %193 = vmatpush.msra.mxu0 %v64
    %194 = vmatpush.msra.mxu0 %v63
    %195 = vmatpush.msra.mxu0 %v62
    %196 = vmatpush.msra.mxu0 %v61
    %197 = vmatmul.f32.gmra.mxu0 %v179
    %v198 = vpop.f32.mrf.mxu0
    %v199 = vadd.f32 0.0, %v198
    %200 = vdwg.mxu0
    %v201 = vadd.f32 %v59, %v199
    %v202 = vtanh.pop %v201
    %v204 = vsel %vm65, %v202, 0
    %206 = vmatpush.msra.mxu0 0.0
    %207 = vmatpush.msra.mxu0 0.0
    %208 = vmatpush.msra.mxu0 0.0
    %209 = vmatpush.msra.mxu0 0.0
    %210 = vmatpush.msra.mxu0 0.0
    %211 = vmatpush.msra.mxu0 0.0
    %212 = vmatpush.msra.mxu0 0.0
    %213 = vmatpush.msra.mxu0 0.0
    %214 = vmatpush.msra.mxu0 0.0
    %215 = vmatpush.msra.mxu0 0.0
    %216 = vmatpush.msra.mxu0 0.0
    %217 = vmatpush.msra.mxu0 0.0
    %218 = vmatpush.msra.mxu0 %v64
    %219 = vmatpush.msra.mxu0 %v63
    %220 = vmatpush.msra.mxu0 %v62
    %221 = vmatpush.msra.mxu0 %v61
    %222 = vmatmul.f32.gmra.mxu0 %v204
    %v223 = vpop.f32.mrf.mxu0
    %v224 = vadd.f32 0.0, %v223
    %225 = vdwg.mxu0
    %v227 = vrot.slane %v224, 6
    %v229 = vadd.f32 %v59, %v227
    %v230 = vtanh.pop %v229
    %v232 = vrot.slane %v230, 2
    %v233 = vsel %vm65, %v232, 0
    %235 = vmatpush.msra.mxu0 0.0
    %236 = vmatpush.msra.mxu0 0.0
    %237 = vmatpush.msra.mxu0 0.0
    %238 = vmatpush.msra.mxu0 0.0
    %239 = vmatpush.msra.mxu0 0.0
    %240 = vmatpush.msra.mxu0 0.0
    %241 = vmatpush.msra.mxu0 0.0
    %242 = vmatpush.msra.mxu0 0.0
    %243 = vmatpush.msra.mxu0 0.0
    %244 = vmatpush.msra.mxu0 0.0
    %245 = vmatpush.msra.mxu0 0.0
    %246 = vmatpush.msra.mxu0 0.0
    %247 = vmatpush.msra.mxu0 %v64
    %248 = vmatpush.msra.mxu0 %v63
    %249 = vmatpush.msra.mxu0 %v62
    %250 = vmatpush.msra.mxu0 %v61
    %251 = vmatmul.f32.gmra.mxu0 %v233
    %v252 = vpop.f32.mrf.mxu0
    %v253 = vadd.f32 0.0, %v252
    %254 = vdwg.mxu0
    %v256 = vrot.slane %v253, 4
    %v258 = vadd.f32 %v59, %v256
    %v259 = vtanh.pop %v258
    %v261 = vrot.slane %v259, 4
    %v262 = vsel %vm65, %v261, 0
    %264 = vmatpush.msra.mxu0 0.0
    %265 = vmatpush.msra.mxu0 0.0
    %266 = vmatpush.msra.mxu0 0.0
    %267 = vmatpush.msra.mxu0 0.0
    %268 = vmatpush.msra.mxu0 0.0
    %269 = vmatpush.msra.mxu0 0.0
    %270 = vmatpush.msra.mxu0 0.0
    %271 = vmatpush.msra.mxu0 0.0
    %272 = vmatpush.msra.mxu0 0.0
    %273 = vmatpush.msra.mxu0 0.0
    %274 = vmatpush.msra.mxu0 0.0
    %275 = vmatpush.msra.mxu0 0.0
    %276 = vmatpush.msra.mxu0 %v64
    %277 = vmatpush.msra.mxu0 %v63
    %278 = vmatpush.msra.mxu0 %v62
    %279 = vmatpush.msra.mxu0 %v61
    %280 = vmatmul.f32.gmra.mxu0 %v262
    %v281 = vpop.f32.mrf.mxu0
    %v282 = vadd.f32 0.0, %v281
    %283 = vdwg.mxu0
    %v285 = vrot.slane %v282, 2
    %v287 = vadd.f32 %v59, %v285
    %v288 = vtanh.pop %v287
    %v289 = vld [vmem:[%s4] sm:$0xff]
    %v290 = vld [vmem:[%s4 + $0x8] sm:$0xff]
    %v291 = vld [vmem:[%s4 + $0x10] sm:$0xff]
    %v292 = vld [vmem:[%s4 + $0x18] sm:$0xff]
    %v293 = vld [vmem:[%s5] sm:$0x1]
    %v295 = vperm.slane %v293, 0
    %v298 = vrot.slane %v288, 6
    %v299 = vsel %vm65, %v298, 0
    %301 = vmatpush.msra.mxu0 0.0
    %302 = vmatpush.msra.mxu0 0.0
    %303 = vmatpush.msra.mxu0 0.0
    %304 = vmatpush.msra.mxu0 0.0
    %305 = vmatpush.msra.mxu0 0.0
    %306 = vmatpush.msra.mxu0 0.0
    %307 = vmatpush.msra.mxu0 0.0
    %308 = vmatpush.msra.mxu0 0.0
    %309 = vmatpush.msra.mxu0 0.0
    %310 = vmatpush.msra.mxu0 0.0
    %311 = vmatpush.msra.mxu0 0.0
    %312 = vmatpush.msra.mxu0 0.0
    %313 = vmatpush.msra.mxu0 %v292
    %314 = vmatpush.msra.mxu0 %v291
    %315 = vmatpush.msra.mxu0 %v290
    %316 = vmatpush.msra.mxu0 %v289
    %317 = vmatmul.f32.gmra.mxu0 %v299
    %v318 = vpop.f32.mrf.mxu0
    %v319 = vadd.f32 %v295, %v318
    %320 = vdwg.mxu0
    %vm321 = vcmask 25600
    %322 = vst.msk [vmem:[#allocation2] sm:$0x3] %vm321, %v319
    // Predicated region
    $region26: #{_rnn_forward_impl.1} parent=1 // pred_check
      _
    $region27: #{_rnn_forward_impl.1} parent=1 // pred_check_branch
      %324 = sbr.rel (0) target = $region29
    $region28: #{_rnn_forward_impl.1} parent=1 // pred_region
      %326 = vsyncadd [#allocation3], 0
      %s328 = sshll.u32 [#allocation2], 4
      %s329 = int_to_ptr.vmem [resolvable:$true] %s328
      %s330 = sshll.u32 %s6, 4
      %s331 = int_to_ptr.hbm [resolvable:$true] %s330
      %333 = dma.vmem_to_hbm [thread:$0]  %s329, 32, %s331, [#allocation3]
    $region29: #{_rnn_forward_impl.1} parent=1 // pred_fallthru
      _
    // Predicated region
    $region30: #{_rnn_forward_impl.1} parent=1 // pred_check
      _
    $region31: #{_rnn_forward_impl.1} parent=1 // pred_check_branch
      %335 = sbr.rel (0) target = $region33
    $region32: #{_rnn_forward_impl.1} parent=1 // pred_region
      %337 = dma.done [#allocation3], 32
    $region33: #{_rnn_forward_impl.1} parent=1 // pred_fallthru
      _
    %338 = vsyncpa [#allocation3], 1

</llo_original>
